<compile_context>
chip_gen: v6e
topology: v6e:2x2x1
jax: 0.10.0
libtpu: 0.0.40
codegen_flags: <defaults>
</compile_context>

<pallas_src>
import functools

import jax
import jax.numpy as jnp
from jax.experimental import pallas as pl
from jax.experimental.pallas import tpu as pltpu


def _conv1d_bn_relu_kernel(x_ref, w_ref, p_ref, o_ref, *,
                           K, C_in, dilation, stride, L_out, N, eps):
    """One grid step: a tile of output channels, full batch & length.

    x_ref : (N, C_in, L_pad)   reflection-padded input (native dtype)
    w_ref : (TCO, K*C_in)      conv weights, contraction ordered (k, c_in)
    p_ref : (TCO, 3)           packed per-channel [conv_bias, bn_gamma, bn_beta]
    o_ref : (TCO, N*L_out)     lane-dense output tile
    """
    # --- im2col slab: (K*C_in, N*L_out), columns ordered (n, l) --------------
    per_batch = []
    for n in range(N):
        taps = []
        if stride == 1:
            xn = x_ref[n]                                   # (C_in, L_pad)
            for k in range(K):
                start = k * dilation
                taps.append(xn[:, start:start + L_out])      # (C_in, L_out)
        else:
            for k in range(K):
                taps.append(
                    x_ref[n, :, pl.ds(k * dilation, L_out, stride=stride)])
        per_batch.append(jnp.concatenate(taps, axis=0))      # (K*C_in, L_out)
    slab = jnp.concatenate(per_batch, axis=1)                # (K*C_in, N*L_out)

    # --- Conv1d: a single MXU matmul, f32 accumulation -----------------------
    acc = jnp.dot(w_ref[...], slab, preferred_element_type=jnp.float32)
    bias = p_ref[:, 0:1].astype(jnp.float32)                 # (TCO, 1)
    acc = acc + bias                                         # (TCO, N*L_out)

    # --- BatchNorm1d (training mode: batch stats over (N, L)) ---------------
    cnt = float(N * L_out)
    mean = jnp.sum(acc, axis=1, keepdims=True) / cnt
    d = acc - mean
    var = jnp.sum(d * d, axis=1, keepdims=True) / cnt        # biased variance
    gamma = p_ref[:, 1:2].astype(jnp.float32)
    beta = p_ref[:, 2:3].astype(jnp.float32)
    y = d * jax.lax.rsqrt(var + eps) * gamma + beta

    # --- ReLU + single lane-dense store --------------------------------------
    o_ref[...] = jnp.maximum(y, 0.0).astype(o_ref.dtype)


def _pick_tile_co(c_out, cap=128):
    """Largest channel tile <= cap that divides C_out (sublane-friendly)."""
    if c_out <= cap:
        return c_out
    for t in range(cap, 0, -1):
        if c_out % t == 0 and t % 8 == 0:
            return t
    return c_out  # fall back: single tile covering all channels


def conv1d_layer_forward(x, weight, bias, gamma, beta, *, kernel_size,
                         stride=1, dilation=1, padding="SAME", eps=1e-5,
                         tile_co=None):
    """Pallas implementation of Conv1d_layer.forward (mode='conv').

    x      : (N, C_in, L)        PyTorch NCL layout
    weight : (C_out, C_in, K)
    bias   : (C_out,)
    gamma  : (C_out,)  BatchNorm weight
    beta   : (C_out,)  BatchNorm bias
    returns: (N, C_out, L_out)
    """
    N, C_in, L = x.shape
    C_out = weight.shape[0]

    if padding == "SAME":
        pad = (kernel_size - 1) * dilation
        l_pad = pad // 2
        r_pad = pad - l_pad
    elif padding == "VALID":
        l_pad = r_pad = 0
    else:
        raise ValueError(f"unsupported padding mode: {padding!r}")

    # TODO(synk): fuse the reflection pad into the kernel (only <=(K-1)*dilation
    # edge columns differ) to avoid this extra HBM round-trip of x.
    x_pad = jnp.pad(x, ((0, 0), (0, 0), (l_pad, r_pad)), mode="reflect")
    L_pad = L + l_pad + r_pad
    L_out = (L_pad - dilation * (kernel_size - 1) - 1) // stride + 1

    # Weights as one (C_out, K*C_in) matrix; contraction ordered (k, c_in) to
    # match the im2col slab built inside the kernel.  Native dtype preserved.
    w2d = jnp.transpose(weight, (0, 2, 1)).reshape(C_out, kernel_size * C_in)
    # Packed per-channel params: one small DMA instead of three.
    params = jnp.stack([bias, gamma, beta], axis=1).astype(jnp.float32)

    tco = tile_co if tile_co is not None else _pick_tile_co(C_out)
    assert C_out % tco == 0, "C_out must be divisible by the channel tile"

    kernel = functools.partial(
        _conv1d_bn_relu_kernel,
        K=kernel_size, C_in=C_in, dilation=dilation, stride=stride,
        L_out=L_out, N=N, eps=eps)

    # TODO(synk): for very long sequences add an L_out tile axis (accumulate BN
    # sum/sumsq across an 'arbitrary' reduction axis) to bound VMEM on v7x.
    out_cl = pl.pallas_call(
        kernel,
        out_shape=jax.ShapeDtypeStruct((C_out, N * L_out), x.dtype),
        grid_spec=pltpu.PrefetchScalarGridSpec(
            num_scalar_prefetch=0,
            grid=(C_out // tco,),
            in_specs=[
                pl.BlockSpec((N, C_in, L_pad), lambda co: (0, 0, 0)),          # x
                pl.BlockSpec((tco, kernel_size * C_in), lambda co: (co, 0)),   # w
                pl.BlockSpec((tco, 3), lambda co: (co, 0)),                    # params
            ],
            out_specs=pl.BlockSpec((tco, N * L_out), lambda co: (co, 0)),
        ),
        compiler_params=pltpu.CompilerParams(dimension_semantics=("parallel",)),
    )(x_pad, w2d, params)

    out = out_cl.reshape(C_out, N, L_out)
    return jnp.transpose(out, (1, 0, 2))                     # (N, C_out, L_out)


def _reference_forward(x, weight, bias, gamma, beta, *, kernel_size, stride,
                       dilation, eps=1e-5):
    """Pure-JAX reference (ReflectionPad1d -> Conv1d -> BatchNorm1d(train) -> ReLU)."""
    pad = (kernel_size - 1) * dilation
    l_pad = pad // 2
    r_pad = pad - l_pad
    x_pad = jnp.pad(x, ((0, 0), (0, 0), (l_pad, r_pad)), mode="reflect")
    y = jax.lax.conv_general_dilated(
        x_pad, weight, window_strides=(stride,), padding="VALID",
        rhs_dilation=(dilation,),
        dimension_numbers=("NCH", "OIH", "NCH"))
    y = y + bias[None, :, None]
    mean = jnp.mean(y, axis=(0, 2), keepdims=True)
    var = jnp.mean((y - mean) ** 2, axis=(0, 2), keepdims=True)
    y = (y - mean) * jax.lax.rsqrt(var + eps)
    y = y * gamma[None, :, None] + beta[None, :, None]
    return jnp.maximum(y, 0.0)


# TODO(synk): 'deconv' (ConvTranspose1d) and 'alias_free' (torchaudio Resample)
# modes of Conv1d_layer are not implemented; only the default mode='conv' path.

if __name__ == "__main__":
    # Module config: Conv1d_layer(in_channels=4, out_channels=16, kernel_size=5)
    N, C_in, C_out, L, K = 2, 4, 16, 32, 5
    stride, dilation = 1, 1

    key = jax.random.PRNGKey(0)
    kx, kw, kb = jax.random.split(key, 3)
    x = jax.random.normal(kx, (N, C_in, L), dtype=jnp.float32)
    weight = jax.random.normal(kw, (C_out, C_in, K), dtype=jnp.float32) * 0.1
    bias = jax.random.normal(kb, (C_out,), dtype=jnp.float32) * 0.1
    gamma = jnp.ones((C_out,), dtype=jnp.float32)    # BatchNorm1d default init
    beta = jnp.zeros((C_out,), dtype=jnp.float32)

    out = conv1d_layer_forward(
        x, weight, bias, gamma, beta,
        kernel_size=K, stride=stride, dilation=dilation, padding="SAME")
    out = jax.block_until_ready(out)

    ref = _reference_forward(
        x, weight, bias, gamma, beta,
        kernel_size=K, stride=stride, dilation=dilation)
    assert out.shape == (N, C_out, L), out.shape
    assert jnp.allclose(out, ref, atol=1e-4, rtol=1e-4), (
        float(jnp.max(jnp.abs(out - ref))))

    print("KERNEL_OK")
</pallas_src>

<mosaic_0001>
module attributes {stable_mosaic.version = 11 : i64} {
  func.func @_conv1d_bn_relu_kernel(%arg0: i32, %arg1: memref<2x4x36xf32, #tpu.memory_space<vmem>>, %arg2: memref<16x20xf32, #tpu.memory_space<vmem>>, %arg3: memref<16x3xf32, #tpu.memory_space<vmem>>, %arg4: memref<16x64xf32, #tpu.memory_space<vmem>>) attributes {dimension_semantics = [#tpu.dimension_semantics<parallel>], iteration_bounds = array<i64: 1>, scalar_prefetch = 0 : i64, scratch_operands = 0 : i64, tpu.core_type = #tpu.core_type<tc>, window_params = [{pipeline_mode = #tpu.pipeline_mode<synchronous>, transform_indices = @transform_0, window_bounds = array<i64: 2, 4, 36>}, {transform_indices = @transform_1, window_bounds = array<i64: 16, 20>}, {transform_indices = @transform_2, window_bounds = array<i64: 16, 3>}, {transform_indices = @transform_3, window_bounds = array<i64: 16, 64>}]} {
    %c0 = arith.constant 0 : index
    %c0_0 = arith.constant 0 : index
    %c0_1 = arith.constant 0 : index
    %0 = vector.load %arg1[%c0, %c0_0, %c0_1] : memref<2x4x36xf32, #tpu.memory_space<vmem>>, vector<1x4x36xf32>
    %1 = vector.shape_cast %0 : vector<1x4x36xf32> to vector<4x36xf32>
    %2 = vector.extract_strided_slice %1 {offsets = [0, 0], sizes = [4, 32], strides = [1, 1]} : vector<4x36xf32> to vector<4x32xf32>
    %3 = vector.extract_strided_slice %1 {offsets = [0, 1], sizes = [4, 32], strides = [1, 1]} : vector<4x36xf32> to vector<4x32xf32>
    %4 = vector.extract_strided_slice %1 {offsets = [0, 2], sizes = [4, 32], strides = [1, 1]} : vector<4x36xf32> to vector<4x32xf32>
    %5 = vector.extract_strided_slice %1 {offsets = [0, 3], sizes = [4, 32], strides = [1, 1]} : vector<4x36xf32> to vector<4x32xf32>
    %6 = vector.extract_strided_slice %1 {offsets = [0, 4], sizes = [4, 32], strides = [1, 1]} : vector<4x36xf32> to vector<4x32xf32>
    %7 = tpu.concatenate %2, %3, %4, %5, %6 in 0 : vector<4x32xf32>, vector<4x32xf32>, vector<4x32xf32>, vector<4x32xf32>, vector<4x32xf32> -> vector<20x32xf32>
    %c1 = arith.constant 1 : index
    %c0_2 = arith.constant 0 : index
    %c0_3 = arith.constant 0 : index
    %8 = vector.load %arg1[%c1, %c0_2, %c0_3] : memref<2x4x36xf32, #tpu.memory_space<vmem>>, vector<1x4x36xf32>
    %9 = vector.shape_cast %8 : vector<1x4x36xf32> to vector<4x36xf32>
    %10 = vector.extract_strided_slice %9 {offsets = [0, 0], sizes = [4, 32], strides = [1, 1]} : vector<4x36xf32> to vector<4x32xf32>
    %11 = vector.extract_strided_slice %9 {offsets = [0, 1], sizes = [4, 32], strides = [1, 1]} : vector<4x36xf32> to vector<4x32xf32>
    %12 = vector.extract_strided_slice %9 {offsets = [0, 2], sizes = [4, 32], strides = [1, 1]} : vector<4x36xf32> to vector<4x32xf32>
    %13 = vector.extract_strided_slice %9 {offsets = [0, 3], sizes = [4, 32], strides = [1, 1]} : vector<4x36xf32> to vector<4x32xf32>
    %14 = vector.extract_strided_slice %9 {offsets = [0, 4], sizes = [4, 32], strides = [1, 1]} : vector<4x36xf32> to vector<4x32xf32>
    %15 = tpu.concatenate %10, %11, %12, %13, %14 in 0 : vector<4x32xf32>, vector<4x32xf32>, vector<4x32xf32>, vector<4x32xf32>, vector<4x32xf32> -> vector<20x32xf32>
    %16 = tpu.concatenate %7, %15 in 1 : vector<20x32xf32>, vector<20x32xf32> -> vector<20x64xf32>
    %c0_4 = arith.constant 0 : index
    %c0_5 = arith.constant 0 : index
    %17 = vector.load %arg2[%c0_4, %c0_5] : memref<16x20xf32, #tpu.memory_space<vmem>>, vector<16x20xf32>
    %cst = arith.constant dense<0.000000e+00> : vector<16x64xf32>
    %18 = tpu.matmul %17, %16, %cst {dimension_numbers = #tpu.dot_dimension_numbers<[1], [0], [0], [1], [0, 0, 1, 1], [], []>} : vector<16x20xf32>, vector<20x64xf32>, vector<16x64xf32> -> vector<16x64xf32>
    %c0_6 = arith.constant 0 : index
    %c0_7 = arith.constant 0 : index
    %19 = vector.load %arg3[%c0_6, %c0_7] : memref<16x3xf32, #tpu.memory_space<vmem>>, vector<16x1xf32>
    %20 = vector.broadcast %19 : vector<16x1xf32> to vector<16x64xf32>
    %21 = arith.addf %18, %20 : vector<16x64xf32>
    %cst_8 = arith.constant dense<0.000000e+00> : vector<16xf32>
    %22 = vector.multi_reduction <add>, %21, %cst_8 [1] : vector<16x64xf32> to vector<16xf32>
    %23 = vector.shape_cast %22 : vector<16xf32> to vector<16x1xf32>
    %cst_9 = arith.constant 6.400000e+01 : f32
    %24 = vector.broadcast %cst_9 : f32 to vector<16x1xf32>
    %25 = arith.divf %23, %24 : vector<16x1xf32>
    %26 = vector.broadcast %25 : vector<16x1xf32> to vector<16x64xf32>
    %27 = arith.subf %21, %26 : vector<16x64xf32>
    %28 = arith.mulf %27, %27 : vector<16x64xf32>
    %cst_10 = arith.constant dense<0.000000e+00> : vector<16xf32>
    %29 = vector.multi_reduction <add>, %28, %cst_10 [1] : vector<16x64xf32> to vector<16xf32>
    %30 = vector.shape_cast %29 : vector<16xf32> to vector<16x1xf32>
    %cst_11 = arith.constant 6.400000e+01 : f32
    %31 = vector.broadcast %cst_11 : f32 to vector<16x1xf32>
    %32 = arith.divf %30, %31 : vector<16x1xf32>
    %c0_12 = arith.constant 0 : index
    %c1_13 = arith.constant 1 : index
    %33 = vector.load %arg3[%c0_12, %c1_13] : memref<16x3xf32, #tpu.memory_space<vmem>>, vector<16x1xf32>
    %c0_14 = arith.constant 0 : index
    %c2 = arith.constant 2 : index
    %34 = vector.load %arg3[%c0_14, %c2] : memref<16x3xf32, #tpu.memory_space<vmem>>, vector<16x1xf32>
    %cst_15 = arith.constant 9.99999974E-6 : f32
    %35 = vector.broadcast %cst_15 : f32 to vector<16x1xf32>
    %36 = arith.addf %32, %35 : vector<16x1xf32>
    %37 = math.rsqrt %36 : vector<16x1xf32>
    %38 = vector.broadcast %37 : vector<16x1xf32> to vector<16x64xf32>
    %39 = arith.mulf %27, %38 : vector<16x64xf32>
    %40 = vector.broadcast %33 : vector<16x1xf32> to vector<16x64xf32>
    %41 = arith.mulf %39, %40 : vector<16x64xf32>
    %42 = vector.broadcast %34 : vector<16x1xf32> to vector<16x64xf32>
    %43 = arith.addf %41, %42 : vector<16x64xf32>
    %cst_16 = arith.constant 0.000000e+00 : f32
    %44 = vector.broadcast %cst_16 : f32 to vector<16x64xf32>
    %45 = arith.maximumf %43, %44 : vector<16x64xf32>
    %c0_17 = arith.constant 0 : index
    %c0_18 = arith.constant 0 : index
    %46 = vector.load %arg4[%c0_17, %c0_18] : memref<16x64xf32, #tpu.memory_space<vmem>>, vector<16x64xf32>
    tpu.vector_store %arg4[%c0_17, %c0_18], %45 {strides = array<i32>} : memref<16x64xf32, #tpu.memory_space<vmem>>, vector<16x64xf32>,
    return
  }
  func.func @transform_0(%arg0: i32) -> (i32, i32, i32) {
    %c0_i32 = arith.constant 0 : i32
    %c0_i32_0 = arith.constant 0 : i32
    %c0_i32_1 = arith.constant 0 : i32
    %c0_i32_2 = arith.constant 0 : i32
    return %c0_i32, %c0_i32_0, %c0_i32_1 : i32, i32, i32
  }
  func.func @transform_1(%arg0: i32) -> (i32, i32) {
    %c0_i32 = arith.constant 0 : i32
    %c0_i32_0 = arith.constant 0 : i32
    return %arg0, %c0_i32 : i32, i32
  }
  func.func @transform_2(%arg0: i32) -> (i32, i32) {
    %c0_i32 = arith.constant 0 : i32
    %c0_i32_0 = arith.constant 0 : i32
    return %arg0, %c0_i32 : i32, i32
  }
  func.func @transform_3(%arg0: i32) -> (i32, i32) {
    %c0_i32 = arith.constant 0 : i32
    %c0_i32_0 = arith.constant 0 : i32
    return %arg0, %c0_i32 : i32, i32
  }
}

</mosaic_0001>

<llo_original>
// kernel: tpu_custom_call.1
$region0: #{tpu_custom_call.1}
  #allocation0 [shape = 'u32[]', space=smem, size = 0x4, offset = 0x4, fixed_abs, tag = 'smem constant byte address 0x4 - core index']
  #allocation1 [shape = 'u32[144,128]{1,0:T(1,128)}', space=vmem, size = 0x12000, scoped, tag = 'internal scratch']
  %s0 = inlined_call_operand.hbm [shape: f32[2,4,36], index: 0, kind: input, shape index: {}]
  %s1 = inlined_call_operand.vmem [shape: f32[16,20], index: 1, kind: input, shape index: {}]
  %s2 = inlined_call_operand.vmem [shape: f32[16,3], index: 2, kind: input, shape index: {}]
  %s3 = inlined_call_operand.hbm [shape: f32[16,64], index: 3, kind: output, shape index: {}]
  %s4 = sld [smem:[#allocation0]]
  $region26: #{tpu_custom_call.1} parent=0
    _
  %s6 = ssub.s32 1, %s4
  %s7 = scalar_select 0, %s6, %s4
  $region1: #{tpu_custom_call.1} parent=0
    #allocation2 [shape = 'u8[4096]{0}', space=vmem, size = 0x1000, scoped, tag = 'input window, operand 0, single buffered']
    #allocation3 [shape = 's32[1]{0}', space=sflag, size = 0x4, scoped, tag = 'scoped memory for tpu_custom_call.1']
    #allocation4 [shape = 's32[1]{0}', space=sflag, size = 0x4, scoped, tag = 'scoped memory for tpu_custom_call.1']
    #allocation5 [shape = 'u8[8192]{0}', space=vmem, size = 0x2000, scoped, tag = 'output window, operand 0, single buffered']
    %8 = vsyncpa [#allocation3], 0
    %9 = vsyncpa [#allocation4], 0
    // Predicated region
    $region2: #{tpu_custom_call.1} parent=1 // pred_check
      _
    $region3: #{tpu_custom_call.1} parent=1 // pred_check_branch
      %11 = sbr.rel (0) target = $region5
    $region4: #{tpu_custom_call.1} parent=1 // pred_region
      %s13 = ssub.s32 128, 128
      %14 = vsyncadd [#allocation3], %s13
      %s15 = sshll.u32 [#allocation2], 4
      %s16 = int_to_ptr.vmem [resolvable:$true] %s15
      %21 = dma.hbm_to_vmem [thread:$0]  %s0, 128, %s16, [#allocation3], 64, 64, 4
    $region5: #{tpu_custom_call.1} parent=1 // pred_fallthru
      _
    // Predicated region
    $region6: #{tpu_custom_call.1} parent=1 // pred_check
      _
    $region7: #{tpu_custom_call.1} parent=1 // pred_check_branch
      %23 = sbr.rel (0) target = $region9
    $region8: #{tpu_custom_call.1} parent=1 // pred_region
      _
    $region9: #{tpu_custom_call.1} parent=1 // pred_fallthru
      _
    // Predicated region
    $region10: #{tpu_custom_call.1} parent=1 // pred_check
      _
    $region11: #{tpu_custom_call.1} parent=1 // pred_check_branch
      %25 = sbr.rel (0) target = $region13
    $region12: #{tpu_custom_call.1} parent=1 // pred_region
      _
    $region13: #{tpu_custom_call.1} parent=1 // pred_fallthru
      _
    // Predicated region
    $region14: #{tpu_custom_call.1} parent=1 // pred_check
      _
    $region15: #{tpu_custom_call.1} parent=1 // pred_check_branch
      %27 = sbr.rel (0) target = $region17
    $region16: #{tpu_custom_call.1} parent=1 // pred_region
      %28 = dma.done [#allocation3], 128
    $region17: #{tpu_custom_call.1} parent=1 // pred_fallthru
      _
    %v29 = vld [vmem:[#allocation2] sm:$0xf]
    %v31 = vrot.slane %v29, 4
    %32 = vrot.lane.b32.xlu0 %v31, 127
    %v33 = vpop.permute.xlu0 %32
    %35 = vrot.lane.b32.xlu0 %v29, 126
    %v36 = vpop.permute.xlu0 %35
    %38 = vrot.lane.b32.xlu0 %v31, 125
    %v39 = vpop.permute.xlu0 %38
    %41 = vrot.lane.b32.xlu0 %v29, 124
    %v42 = vpop.permute.xlu0 %41
    %vm44 = vcmask 1043456
    %v45 = vsel %vm44, %v29, %v33
    %v46 = vsel %vm44, %v36, %v39
    %s47 = scalar_lea.vmem [#allocation2], 4
    %v48 = vld [vmem:[%s47] sm:$0xf]
    %v50 = vrot.slane %v48, 4
    %51 = vrot.lane.b32.xlu0 %v50, 127
    %v52 = vpop.permute.xlu0 %51
    %54 = vrot.lane.b32.xlu0 %v48, 126
    %v55 = vpop.permute.xlu0 %54
    %57 = vrot.lane.b32.xlu0 %v50, 125
    %v58 = vpop.permute.xlu0 %57
    %60 = vrot.lane.b32.xlu0 %v48, 124
    %v61 = vpop.permute.xlu0 %60
    %v62 = vsel %vm44, %v48, %v52
    %v63 = vsel %vm44, %v55, %v58
    %66 = vrot.lane.b32.xlu0 %v62, 32
    %v67 = vpop.permute.xlu0 %66
    %68 = vrot.lane.b32.xlu0 %v63, 32
    %v69 = vpop.permute.xlu0 %68
    %70 = vrot.lane.b32.xlu0 %v61, 32
    %v71 = vpop.permute.xlu0 %70
    %vm75 = vcmask 261120
    %v76 = vsel %vm75, %v45, %v67
    %v77 = vsel %vm75, %v46, %v69
    %v78 = vsel %vm75, %v42, %v71
    %v79 = vld [vmem:[%s1] sm:$0xff]
    %v80 = vld [vmem:[%s1 + $0x8] sm:$0xff]
    %v81 = vld [vmem:[%s2] sm:$0xff]
    %v82 = vld [vmem:[%s2 + $0x8] sm:$0xff]
    %84 = vset.pattern.permute.xlu0 0
    %85 = vperm.xlu0 %84, %v81
    %v86 = vpop.permute.xlu0 %85
    %89 = vset.pattern.permute.xlu0 0
    %90 = vperm.xlu0 %89, %v82
    %v91 = vpop.permute.xlu0 %90
    %vm93 = vcmask 162816
    %v95 = vsel %vm93, %v79, 0
    %v98 = vsel %vm93, %v80, 0
    %v101 = vsel %vm44, %v78, 0
    %103 = vmatprep.subr.mxu0 0.0
    %104 = vmatpush1.msra.mxu0 0.0
    %105 = vmatprep.subr.mxu0 0.0
    %106 = vmatpush1.msra.mxu0 0.0
    %107 = vmatprep.subr.mxu0 0.0
    %108 = vmatpush1.msra.mxu0 0.0
    %109 = vmatprep.subr.mxu0 0.0
    %110 = vmatpush1.msra.mxu0 0.0
    %111 = vmatprep.subr.mxu0 0.0
    %112 = vmatpush1.msra.mxu0 0.0
    %113 = vmatprep.subr.mxu0 0.0
    %114 = vmatpush1.msra.mxu0 0.0
    %115 = vmatprep.subr.mxu0 0.0
    %116 = vmatpush1.msra.mxu0 0.0
    %117 = vmatprep.subr.mxu0 0.0
    %118 = vmatpush1.msra.mxu0 0.0
    %119 = vmatprep.subr.mxu0 0.0
    %120 = vmatpush1.msra.mxu0 0.0
    %121 = vmatprep.subr.mxu0 0.0
    %122 = vmatpush1.msra.mxu0 0.0
    %123 = vmatprep.subr.mxu0 0.0
    %124 = vmatpush1.msra.mxu0 0.0
    %125 = vmatprep.subr.mxu0 0.0
    %126 = vmatpush1.msra.mxu0 0.0
    %127 = vmatprep.subr.mxu0 0.0
    %128 = vmatpush1.msra.mxu0 0.0
    %129 = vmatprep.subr.mxu0 0.0
    %130 = vmatpush1.msra.mxu0 %v101
    %131 = vmatprep.subr.mxu0 0.0
    %132 = vmatpush1.msra.mxu0 %v77
    %133 = vmatprep.subr.mxu0 0.0
    %134 = vmatpush1.msra.mxu0 %v76
    %135 = vmatprep.subr.mxu0 0.0
    %136 = vmatpush2.msra.mxu0 0.0
    %137 = vmatprep.subr.mxu0 0.0
    %138 = vmatpush2.msra.mxu0 0.0
    %139 = vmatprep.subr.mxu0 0.0
    %140 = vmatpush2.msra.mxu0 0.0
    %141 = vmatprep.subr.mxu0 0.0
    %142 = vmatpush2.msra.mxu0 0.0
    %143 = vmatprep.subr.mxu0 0.0
    %144 = vmatpush2.msra.mxu0 0.0
    %145 = vmatprep.subr.mxu0 0.0
    %146 = vmatpush2.msra.mxu0 0.0
    %147 = vmatprep.subr.mxu0 0.0
    %148 = vmatpush2.msra.mxu0 0.0
    %149 = vmatprep.subr.mxu0 0.0
    %150 = vmatpush2.msra.mxu0 0.0
    %151 = vmatprep.subr.mxu0 0.0
    %152 = vmatpush2.msra.mxu0 0.0
    %153 = vmatprep.subr.mxu0 0.0
    %154 = vmatpush2.msra.mxu0 0.0
    %155 = vmatprep.subr.mxu0 0.0
    %156 = vmatpush2.msra.mxu0 0.0
    %157 = vmatprep.subr.mxu0 0.0
    %158 = vmatpush2.msra.mxu0 0.0
    %159 = vmatprep.subr.mxu0 0.0
    %160 = vmatpush2.msra.mxu0 0.0
    %161 = vmatprep.subr.mxu0 0.0
    %162 = vmatpush2.msra.mxu0 0.0
    %163 = vmatprep.subr.mxu0 0.0
    %164 = vmatpush2.msra.mxu0 0.0
    %165 = vmatprep.subr.mxu0 0.0
    %166 = vmatpush2.msra.mxu0 0.0
    %167 = vmatprep.mubr.f32.mxu0 0.0
    %168 = vmatmul.mubr.f32.gmra.mxu0 %v95
    %v169 = vpop.f32.mrf.mxu0
    %v170 = vadd.f32 %v86, %v169
    %v171 = vpop.f32.mrf.mxu0
    %172 = vmatprep.mubr.f32.mxu0 0.0
    %173 = vmatmul.mubr.f32.gmra.mxu0 %v98
    %v174 = vpop.f32.mrf.mxu0
    %v175 = vadd.f32 %v91, %v174
    %v176 = vpop.f32.mrf.mxu0
    %177 = vdwg.mxu0
    %vm178 = vcmask 523264
    %v179 = vsel %vm178, %v170, 0.0
    %180 = vadd.xlane.f32.xlu0 %v179
    %v181 = vpop.xlane.xlu0 %180
    %v182 = vsel %vm178, %v175, 0.0
    %183 = vadd.xlane.f32.xlu0 %v182
    %v184 = vpop.xlane.xlu0 %183
    %v185 = vrcp.pop 64.0
    %v186 = vmul.f32 %v181, %v185
    %v187 = vmul.f32 %v184, %v185
    %v188 = vsub.f32 %v170, %v186
    %v189 = vsub.f32 %v175, %v187
    %v190 = vmul.f32 %v188, %v188
    %v191 = vmul.f32 %v189, %v189
    %v192 = vsel %vm178, %v190, 0.0
    %193 = vadd.xlane.f32.xlu0 %v192
    %v194 = vpop.xlane.xlu0 %193
    %v195 = vsel %vm178, %v191, 0.0
    %196 = vadd.xlane.f32.xlu0 %v195
    %v197 = vpop.xlane.xlu0 %196
    %v198 = vmul.f32 %v194, %v185
    %v199 = vmul.f32 %v197, %v185
    %v200 = vadd.f32 %v198, 1e-05
    %v201 = vadd.f32 %v199, 1e-05
    %v202 = vrsqrt.pop %v200
    %v203 = vrsqrt.pop %v201
    %v204 = vmul.f32 %v188, %v202
    %v205 = vmul.f32 %v189, %v203
    %206 = vset.pattern.permute.xlu0 1
    %207 = vperm.xlu0 %206, %v81
    %v208 = vpop.permute.xlu0 %207
    %210 = vset.pattern.permute.xlu0 1
    %211 = vperm.xlu0 %210, %v82
    %v212 = vpop.permute.xlu0 %211
    %v214 = vmul.f32 %v204, %v208
    %v215 = vmul.f32 %v205, %v212
    %216 = vset.pattern.permute.xlu0 2
    %217 = vperm.xlu0 %216, %v81
    %v218 = vpop.permute.xlu0 %217
    %220 = vset.pattern.permute.xlu0 2
    %221 = vperm.xlu0 %220, %v82
    %v222 = vpop.permute.xlu0 %221
    %v224 = vadd.f32 %v214, %v218
    %v225 = vadd.f32 %v215, %v222
    %v226 = vmax.f32 %v224, 0.0
    %v227 = vmax.f32 %v225, 0.0
    %228 = vst.msk [vmem:[#allocation5] sm:$0xff] %vm178, %v226
    %229 = vst.msk [vmem:[#allocation5 + $0x8] sm:$0xff] %vm178, %v227
    // Predicated region
    $region18: #{tpu_custom_call.1} parent=1 // pred_check
      _
    $region19: #{tpu_custom_call.1} parent=1 // pred_check_branch
      %231 = sbr.rel (0) target = $region21
    $region20: #{tpu_custom_call.1} parent=1 // pred_region
      %s233 = ssub.s32 256, 256
      %234 = vsyncadd [#allocation4], %s233
      %s235 = sshll.u32 [#allocation5], 4
      %s236 = int_to_ptr.vmem [resolvable:$true] %s235
      %241 = dma.vmem_to_hbm [thread:$0]  %s236, 256, %s3, [#allocation4], 128, 128, 8
    $region21: #{tpu_custom_call.1} parent=1 // pred_fallthru
      _
    // Predicated region
    $region22: #{tpu_custom_call.1} parent=1 // pred_check
      _
    $region23: #{tpu_custom_call.1} parent=1 // pred_check_branch
      %243 = sbr.rel (0) target = $region25
    $region24: #{tpu_custom_call.1} parent=1 // pred_region
      %244 = dma.done [#allocation4], 256
    $region25: #{tpu_custom_call.1} parent=1 // pred_fallthru
      _
    %245 = vsyncpa [#allocation3], 1
    %246 = vsyncpa [#allocation4], 1

</llo_original>
